<compile_context>
chip_gen: v5e
topology: v5e:2x2
jax: 0.10.0
libtpu: 0.0.40
codegen_flags: <defaults>
</compile_context>

<pallas_src>
import functools
import math

import jax
import jax.numpy as jnp
import numpy as np
from jax.experimental import pallas as pl
from jax.experimental.pallas import tpu as pltpu


# ---------------------------------------------------------------------------
# Pallas kernel: transposed 1x1 conv (matmul) + bias + sigmoid + YOLO decode
# ---------------------------------------------------------------------------
def _detect_kernel(x_ref, w_ref, chp_ref, *out_refs, stride, nx, with_raw):
    # Packed per-output-channel parameters (channel = a*no + j):
    #   [:,0]=bias  [:,1]=sel_x(j==0)  [:,2]=sel_y(j==1)  [:,3]=wh mask  [:,4]=anchor*stride
    chp = chp_ref[...]                       # (Cout, 5)
    bias = chp[:, 0:1]
    selx = chp[:, 1:2]
    sely = chp[:, 2:3]
    whm = chp[:, 3:4]
    anch = chp[:, 4:5]

    # 1x1 conv over channels == matmul on the MXU (pixels on lanes).
    # Inputs may be bf16; accumulation is forced to f32.
    raw = jnp.dot(w_ref[...], x_ref[...],
                  preferred_element_type=jnp.float32) + bias

    if with_raw:
        raw_ref, dec_ref = out_refs
        raw_ref[...] = raw.astype(raw_ref.dtype)   # training-path output
    else:
        (dec_ref,) = out_refs

    # Inference decode (sigmoid on EUP, rest on VPU) -- all math in f32.
    y = jax.nn.sigmoid(raw)

    # Per-pixel grid coords computed in-kernel from the lane index.
    tp = x_ref.shape[1]
    pix0 = pl.program_id(1) * tp
    p = (jax.lax.broadcasted_iota(jnp.int32, (1, tp), 1) + pix0).astype(jnp.float32)
    # floor((p + 0.5)/nx) == p // nx for integer p; the +0.5 margin makes the
    # float division robust to rounding.  Exact only while p << 2**23 (the
    # wrapper asserts ny*nx < 2**22).  Padded pixels (p >= ny*nx) produce
    # garbage gx/gy and decoded values; the wrapper slices them off.
    gy = jnp.floor((p + 0.5) / float(nx))    # (1, tp) image row
    gx = p - gy * float(nx)                  # (1, tp) image col

    gridval = selx * gx + sely * gy          # (Cout, tp) outer broadcast
    xy_mask = selx + sely                    # 1 on channels 0,1

    y2 = y * 2.0
    xy_dec = (y2 - 0.5 + gridval) * stride
    wh_dec = (y2 * y2) * anch
    # Masks are disjoint {0,1} -> single blend instead of nested where.
    dec = y + xy_mask * (xy_dec - y) + whm * (wh_dec - y)
    dec_ref[...] = dec.astype(dec_ref.dtype)


def detect_level_pallas(x3, w, chp, *, stride, nx, tp, with_raw=True,
                        raw_dtype=jnp.float32, dec_dtype=jnp.float32):
    """One pyramid level. x3: (bs, Cin, P_pad) with P_pad a multiple of tp."""
    bs, cin, p_pad = x3.shape
    cout = w.shape[0]
    assert p_pad % tp == 0, (p_pad, tp)
    grid = (bs, p_pad // tp)

    out_shapes = []
    out_specs = []
    if with_raw:
        out_shapes.append(jax.ShapeDtypeStruct((bs, cout, p_pad), raw_dtype))
        out_specs.append(pl.BlockSpec((None, cout, tp), lambda b, i: (b, 0, i)))
    out_shapes.append(jax.ShapeDtypeStruct((bs, cout, p_pad), dec_dtype))
    out_specs.append(pl.BlockSpec((None, cout, tp), lambda b, i: (b, 0, i)))

    kernel = functools.partial(_detect_kernel, stride=float(stride),
                               nx=int(nx), with_raw=with_raw)
    outs = pl.pallas_call(
        kernel,
        out_shape=tuple(out_shapes),
        grid_spec=pltpu.PrefetchScalarGridSpec(
            num_scalar_prefetch=0,
            grid=grid,
            in_specs=[
                # feature map: channels on sublanes, pixels on lanes
                pl.BlockSpec((None, cin, tp), lambda b, i: (b, 0, i)),
                # 1x1 conv weight (Cout, Cin) -- constant index, fetched once
                pl.BlockSpec((cout, cin), lambda b, i: (0, 0)),
                # packed per-channel decode table -- constant index, fetched once
                pl.BlockSpec((cout, 5), lambda b, i: (0, 0)),
            ],
            out_specs=tuple(out_specs),
        ),
        compiler_params=pltpu.CompilerParams(
            dimension_semantics=("parallel", "parallel"),
            vmem_limit_bytes=32 * 1024 * 1024,
        ),
    )(x3, w, chp)

    if with_raw:
        raw, dec = outs
    else:
        raw = None
        (dec,) = outs
    return raw, dec


# ---------------------------------------------------------------------------
# Detect head wrapper (JAX glue around the Pallas kernel)
# ---------------------------------------------------------------------------
def detect_forward(xs, weights, biases, anchors, strides, na, no, *,
                   want_raw=True, compute_dtype=jnp.float32,
                   raw_dtype=jnp.float32, dec_dtype=jnp.float32):
    """Inference forward of Detect: returns (cat(z,1), [x_i] or None)."""
    bs = xs[0].shape[0]
    z, x_out = [], []
    for i, x in enumerate(xs):
        _, cin, ny, nx = x.shape
        cout = na * no
        P = ny * nx
        # f32 floor-div grid-coordinate trick is exact only while the pixel
        # index stays well inside f32 integer range.
        assert P < (1 << 22), "ny*nx too large for the f32 grid-coord trick"

        # Lane-dense pixel tile: >=512 always; 1024 for large levels.
        # (Pad P up to the tile instead of requiring the tile to divide P.)
        tp = 1024 if P >= 4096 else 512
        P_pad = pl.cdiv(P, tp) * tp

        # NCHW -> (bs, Cin, ny*nx): contiguous reshape (no transpose HBM pass).
        x3 = x.reshape(bs, cin, P)
        if P_pad != P:
            x3 = jnp.pad(x3, ((0, 0), (0, 0), (0, P_pad - P)))
        x3 = x3.astype(compute_dtype)
        w = weights[i].reshape(cout, cin).astype(compute_dtype)

        # Packed per-channel decode parameters (channel = a*no + j).
        c = jnp.arange(cout)
        j = c % no
        a_idx = c // no
        anch_wh = anchors[i] * strides[i]             # (na, 2) anchor_grid values
        anch = jnp.where(j == 2, anch_wh[a_idx, 0],
                         jnp.where(j == 3, anch_wh[a_idx, 1], 0.0))
        chp = jnp.stack([
            biases[i].reshape(cout).astype(jnp.float32),
            (j == 0).astype(jnp.float32),
            (j == 1).astype(jnp.float32),
            ((j == 2) | (j == 3)).astype(jnp.float32),
            anch.astype(jnp.float32),
        ], axis=1)                                    # (Cout, 5)

        raw, dec = detect_level_pallas(
            x3, w, chp, stride=strides[i], nx=nx, tp=tp,
            with_raw=want_raw, raw_dtype=raw_dtype, dec_dtype=dec_dtype)

        # Back to PyTorch conventions (slice off padded pixels):
        #   raw -> (bs, na, ny, nx, no);  dec -> (bs, na*ny*nx, no)
        if want_raw:
            raw5 = (raw[:, :, :P].reshape(bs, na, no, ny, nx)
                    .transpose(0, 1, 3, 4, 2))
            x_out.append(raw5)
        dec5 = (dec[:, :, :P].reshape(bs, na, no, ny, nx)
                .transpose(0, 1, 3, 4, 2))
        z.append(dec5.reshape(bs, na * ny * nx, no))
    return jnp.concatenate(z, axis=1), (x_out if want_raw else None)


# ---------------------------------------------------------------------------
# Pure-JAX reference (mirrors the PyTorch forward) for verification
# ---------------------------------------------------------------------------
def detect_reference(xs, weights, biases, anchors, strides, na, no):
    bs = xs[0].shape[0]
    z, x_out = [], []
    for i, x in enumerate(xs):
        _, cin, ny, nx = x.shape
        cout = na * no
        w = weights[i].reshape(cout, cin)
        conv = jnp.einsum("bchw,oc->bohw", x, w,
                          precision=jax.lax.Precision.HIGHEST)
        conv = conv + biases[i][None, :, None, None]
        xi = conv.reshape(bs, na, no, ny, nx).transpose(0, 1, 3, 4, 2)
        x_out.append(xi)
        y = jax.nn.sigmoid(xi)
        yy, xx = jnp.meshgrid(jnp.arange(ny), jnp.arange(nx), indexing="ij")
        grid = jnp.stack([xx, yy], -1).astype(jnp.float32)[None, None]
        anchor_grid = (anchors[i] * strides[i]).reshape(1, na, 1, 1, 2)
        xy = (y[..., 0:2] * 2.0 - 0.5 + grid) * strides[i]
        wh = (y[..., 2:4] * 2.0) ** 2 * anchor_grid
        yd = jnp.concatenate([xy, wh, y[..., 4:]], axis=-1)
        z.append(yd.reshape(bs, -1, no))
    return jnp.concatenate(z, axis=1), x_out


# ---------------------------------------------------------------------------
# Deterministic parameter construction (mimics Detect.__init__ shapes/biases)
# ---------------------------------------------------------------------------
def make_detect_params(key, ch, strides, na, no, nc, nk):
    weights, biases = [], []
    cout = na * no
    for c, s in zip(ch, strides):
        key, kw, kb = jax.random.split(key, 3)
        bound = 1.0 / math.sqrt(c)                    # 1x1 conv fan-in
        w = jax.random.uniform(kw, (cout, c, 1, 1), jnp.float32, -bound, bound)
        b = jax.random.uniform(kb, (cout,), jnp.float32, -bound, bound)
        # _initialize_biases (YOLOv5-style)
        b2 = b.reshape(na, no)
        b2 = b2.at[:, 4].add(math.log(8.0 / (640.0 / s) ** 2))
        cls_start = 5 + nk * 3
        b2 = b2.at[:, cls_start:].add(math.log(0.6 / (nc - 0.99)))
        weights.append(w)
        biases.append(b2.reshape(-1))
    return weights, biases


if __name__ == "__main__":
    # small synthetic config
    nc = 2
    nk = 0                                     # num_keypoints
    na = 3
    no = nc + nk * 3 + 5                       # = 7
    nl = 2
    strides = [8, 16]
    img_size = 64
    ch = [8, 16]                               # neck channels per level
    bs = 2
    anchors = jnp.array([[10., 13., 16., 30., 33., 23.],
                         [30., 61., 62., 45., 59., 119.]],
                        dtype=jnp.float32).reshape(nl, na, 2)

    key = jax.random.PRNGKey(0)
    key, k0, k1 = jax.random.split(key, 3)
    xs = [
        jax.random.normal(k0, (bs, ch[0], img_size // strides[0],
                               img_size // strides[0]), jnp.float32),
        jax.random.normal(k1, (bs, ch[1], img_size // strides[1],
                               img_size // strides[1]), jnp.float32),
    ]
    weights, biases = make_detect_params(key, ch, strides, na, no, nc, nk)

    z_ref, x_ref = detect_reference(xs, weights, biases, anchors, strides, na, no)

    # --- Run A: f32 end-to-end, full forward contract (z and raw x list). ---
    z, x_out = detect_forward(xs, weights, biases, anchors, strides, na, no,
                              want_raw=True, compute_dtype=jnp.float32,
                              raw_dtype=jnp.float32)
    z = jax.block_until_ready(z)
    x_out = [jax.block_until_ready(t) for t in x_out]
    # Tolerance leaves headroom for MXU f32 rounding; semantic bugs would be
    # orders of magnitude larger.
    np.testing.assert_allclose(np.asarray(z), np.asarray(z_ref),
                               rtol=1e-2, atol=1e-2)
    for a, b in zip(x_out, x_ref):
        np.testing.assert_allclose(np.asarray(a), np.asarray(b),
                                   rtol=1e-2, atol=1e-2)

    # --- Run B: inference-optimized path (bf16 I/O, raw output dropped). ---
    z_fast, x_none = detect_forward(xs, weights, biases, anchors, strides, na, no,
                                    want_raw=False, compute_dtype=jnp.bfloat16,
                                    dec_dtype=jnp.float32)
    z_fast = jax.block_until_ready(z_fast)
    assert x_none is None
    # bf16 inputs -> looser tolerance (decode math itself stays f32).
    np.testing.assert_allclose(np.asarray(z_fast), np.asarray(z_ref),
                               rtol=5e-2, atol=2e-1)

    print("KERNEL_OK")
</pallas_src>

<mosaic_0001>
module attributes {stable_mosaic.version = 11 : i64} {
  func.func @_detect_kernel(%arg0: i32, %arg1: i32, %arg2: memref<1x8x512xf32, #tpu.memory_space<vmem>>, %arg3: memref<21x8xf32, #tpu.memory_space<vmem>>, %arg4: memref<21x5xf32, #tpu.memory_space<vmem>>, %arg5: memref<1x21x512xf32, #tpu.memory_space<vmem>>, %arg6: memref<1x21x512xf32, #tpu.memory_space<vmem>>) attributes {dimension_semantics = [#tpu.dimension_semantics<parallel>, #tpu.dimension_semantics<parallel>], iteration_bounds = array<i64: 2, 1>, scalar_prefetch = 0 : i64, scratch_operands = 0 : i64, tpu.core_type = #tpu.core_type<tc>, window_params = [{transform_indices = @transform_0, window_bounds = array<i64: 1, 8, 512>}, {pipeline_mode = #tpu.pipeline_mode<synchronous>, transform_indices = @transform_1, window_bounds = array<i64: 21, 8>}, {pipeline_mode = #tpu.pipeline_mode<synchronous>, transform_indices = @transform_2, window_bounds = array<i64: 21, 5>}, {transform_indices = @transform_3, window_bounds = array<i64: 1, 21, 512>}, {transform_indices = @transform_4, window_bounds = array<i64: 1, 21, 512>}]} {
    %c0 = arith.constant 0 : index
    %c0_0 = arith.constant 0 : index
    %0 = vector.load %arg4[%c0, %c0_0] : memref<21x5xf32, #tpu.memory_space<vmem>>, vector<21x5xf32>
    %1 = vector.extract_strided_slice %0 {offsets = [0, 0], sizes = [21, 1], strides = [1, 1]} : vector<21x5xf32> to vector<21x1xf32>
    %2 = vector.extract_strided_slice %0 {offsets = [0, 1], sizes = [21, 1], strides = [1, 1]} : vector<21x5xf32> to vector<21x1xf32>
    %3 = vector.extract_strided_slice %0 {offsets = [0, 2], sizes = [21, 1], strides = [1, 1]} : vector<21x5xf32> to vector<21x1xf32>
    %4 = vector.extract_strided_slice %0 {offsets = [0, 3], sizes = [21, 1], strides = [1, 1]} : vector<21x5xf32> to vector<21x1xf32>
    %5 = vector.extract_strided_slice %0 {offsets = [0, 4], sizes = [21, 1], strides = [1, 1]} : vector<21x5xf32> to vector<21x1xf32>
    %c0_1 = arith.constant 0 : index
    %c0_2 = arith.constant 0 : index
    %6 = vector.load %arg3[%c0_1, %c0_2] : memref<21x8xf32, #tpu.memory_space<vmem>>, vector<21x8xf32>
    %c0_3 = arith.constant 0 : index
    %c0_4 = arith.constant 0 : index
    %c0_5 = arith.constant 0 : index
    %7 = vector.load %arg2[%c0_3, %c0_4, %c0_5] : memref<1x8x512xf32, #tpu.memory_space<vmem>>, vector<1x8x512xf32>
    %8 = vector.shape_cast %7 : vector<1x8x512xf32> to vector<8x512xf32>
    %cst = arith.constant dense<0.000000e+00> : vector<21x512xf32>
    %9 = tpu.matmul %6, %8, %cst {dimension_numbers = #tpu.dot_dimension_numbers<[1], [0], [0], [1], [0, 0, 1, 1], [], []>} : vector<21x8xf32>, vector<8x512xf32>, vector<21x512xf32> -> vector<21x512xf32>
    %10 = vector.broadcast %1 : vector<21x1xf32> to vector<21x512xf32>
    %11 = arith.addf %9, %10 : vector<21x512xf32>
    %c0_6 = arith.constant 0 : index
    %c0_7 = arith.constant 0 : index
    %c0_8 = arith.constant 0 : index
    %12 = vector.load %arg5[%c0_6, %c0_7, %c0_8] : memref<1x21x512xf32, #tpu.memory_space<vmem>>, vector<1x21x512xf32>
    %13 = vector.shape_cast %12 : vector<1x21x512xf32> to vector<21x512xf32>
    %14 = vector.shape_cast %11 : vector<21x512xf32> to vector<1x21x512xf32>
    tpu.vector_store %arg5[%c0_6, %c0_7, %c0_8], %14 {strides = array<i32>} : memref<1x21x512xf32, #tpu.memory_space<vmem>>, vector<1x21x512xf32>,
    %15 = arith.negf %11 : vector<21x512xf32>
    %16 = math.exp %15 : vector<21x512xf32>
    %cst_9 = arith.constant 1.000000e+00 : f32
    %17 = vector.broadcast %cst_9 : f32 to vector<21x512xf32>
    %18 = arith.addf %17, %16 : vector<21x512xf32>
    %19 = arith.divf %17, %18 : vector<21x512xf32>
    %c512_i32 = arith.constant 512 : i32
    %20 = arith.muli %arg1, %c512_i32 : i32
    %21 = tpu.iota {dimensions = array<i32: 1>} : vector<1x512xi32>
    %22 = vector.broadcast %20 : i32 to vector<1x512xi32>
    %23 = arith.addi %21, %22 : vector<1x512xi32>
    %24 = arith.sitofp %23 : vector<1x512xi32> to vector<1x512xf32>
    %cst_10 = arith.constant 5.000000e-01 : f32
    %25 = vector.broadcast %cst_10 : f32 to vector<1x512xf32>
    %26 = arith.addf %24, %25 : vector<1x512xf32>
    %cst_11 = arith.constant 8.000000e+00 : f32
    %27 = vector.broadcast %cst_11 : f32 to vector<1x512xf32>
    %28 = arith.divf %26, %27 : vector<1x512xf32>
    %29 = math.floor %28 : vector<1x512xf32>
    %cst_12 = arith.constant 8.000000e+00 : f32
    %30 = vector.broadcast %cst_12 : f32 to vector<1x512xf32>
    %31 = arith.mulf %29, %30 : vector<1x512xf32>
    %32 = arith.subf %24, %31 : vector<1x512xf32>
    %33 = vector.broadcast %2 : vector<21x1xf32> to vector<21x512xf32>
    %34 = vector.broadcast %32 : vector<1x512xf32> to vector<21x512xf32>
    %35 = arith.mulf %33, %34 : vector<21x512xf32>
    %36 = vector.broadcast %3 : vector<21x1xf32> to vector<21x512xf32>
    %37 = vector.broadcast %29 : vector<1x512xf32> to vector<21x512xf32>
    %38 = arith.mulf %36, %37 : vector<21x512xf32>
    %39 = arith.addf %35, %38 : vector<21x512xf32>
    %40 = arith.addf %2, %3 : vector<21x1xf32>
    %cst_13 = arith.constant 2.000000e+00 : f32
    %41 = vector.broadcast %cst_13 : f32 to vector<21x512xf32>
    %42 = arith.mulf %19, %41 : vector<21x512xf32>
    %cst_14 = arith.constant 5.000000e-01 : f32
    %43 = vector.broadcast %cst_14 : f32 to vector<21x512xf32>
    %44 = arith.subf %42, %43 : vector<21x512xf32>
    %45 = arith.addf %44, %39 : vector<21x512xf32>
    %cst_15 = arith.constant 8.000000e+00 : f32
    %46 = vector.broadcast %cst_15 : f32 to vector<21x512xf32>
    %47 = arith.mulf %45, %46 : vector<21x512xf32>
    %48 = arith.mulf %42, %42 : vector<21x512xf32>
    %49 = vector.broadcast %5 : vector<21x1xf32> to vector<21x512xf32>
    %50 = arith.mulf %48, %49 : vector<21x512xf32>
    %51 = arith.subf %47, %19 : vector<21x512xf32>
    %52 = vector.broadcast %40 : vector<21x1xf32> to vector<21x512xf32>
    %53 = arith.mulf %52, %51 : vector<21x512xf32>
    %54 = arith.addf %19, %53 : vector<21x512xf32>
    %55 = arith.subf %50, %19 : vector<21x512xf32>
    %56 = vector.broadcast %4 : vector<21x1xf32> to vector<21x512xf32>
    %57 = arith.mulf %56, %55 : vector<21x512xf32>
    %58 = arith.addf %54, %57 : vector<21x512xf32>
    %c0_16 = arith.constant 0 : index
    %c0_17 = arith.constant 0 : index
    %c0_18 = arith.constant 0 : index
    %59 = vector.load %arg6[%c0_16, %c0_17, %c0_18] : memref<1x21x512xf32, #tpu.memory_space<vmem>>, vector<1x21x512xf32>
    %60 = vector.shape_cast %59 : vector<1x21x512xf32> to vector<21x512xf32>
    %61 = vector.shape_cast %58 : vector<21x512xf32> to vector<1x21x512xf32>
    tpu.vector_store %arg6[%c0_16, %c0_17, %c0_18], %61 {strides = array<i32>} : memref<1x21x512xf32, #tpu.memory_space<vmem>>, vector<1x21x512xf32>,
    return
  }
  func.func @transform_0(%arg0: i32, %arg1: i32) -> (i32, i32, i32) {
    %c0_i32 = arith.constant 0 : i32
    %c0_i32_0 = arith.constant 0 : i32
    return %arg0, %c0_i32, %arg1 : i32, i32, i32
  }
  func.func @transform_1(%arg0: i32, %arg1: i32) -> (i32, i32) {
    %c0_i32 = arith.constant 0 : i32
    %c0_i32_0 = arith.constant 0 : i32
    %c0_i32_1 = arith.constant 0 : i32
    return %c0_i32, %c0_i32_0 : i32, i32
  }
  func.func @transform_2(%arg0: i32, %arg1: i32) -> (i32, i32) {
    %c0_i32 = arith.constant 0 : i32
    %c0_i32_0 = arith.constant 0 : i32
    %c0_i32_1 = arith.constant 0 : i32
    return %c0_i32, %c0_i32_0 : i32, i32
  }
  func.func @transform_3(%arg0: i32, %arg1: i32) -> (i32, i32, i32) {
    %c0_i32 = arith.constant 0 : i32
    %c0_i32_0 = arith.constant 0 : i32
    return %arg0, %c0_i32, %arg1 : i32, i32, i32
  }
  func.func @transform_4(%arg0: i32, %arg1: i32) -> (i32, i32, i32) {
    %c0_i32 = arith.constant 0 : i32
    %c0_i32_0 = arith.constant 0 : i32
    return %arg0, %c0_i32, %arg1 : i32, i32, i32
  }
}

</mosaic_0001>

<llo_original>
// kernel: tpu_custom_call.1
$region0: #{tpu_custom_call.1}
  #allocation0 [shape = 'u32[]', space=smem, size = 0x4, offset = 0x4, fixed_abs, tag = 'smem constant byte address 0x4 - core index']
  #allocation1 [shape = 'u32[72,128]{1,0:T(1,128)}', space=vmem, size = 0x9000, scoped, tag = 'internal scratch']
  %s0 = inlined_call_operand.hbm [shape: f32[2,8,512], index: 0, kind: input, shape index: {}]
  %s1 = inlined_call_operand.vmem [shape: f32[21,8], index: 1, kind: input, shape index: {}]
  %s2 = inlined_call_operand.vmem [shape: f32[21,5], index: 2, kind: input, shape index: {}]
  %s3 = inlined_call_operand.vmem [shape: f32[2,21,512], index: 3, kind: output, shape index: {0}]
  %s4 = inlined_call_operand.vmem [shape: f32[2,21,512], index: 4, kind: output, shape index: {1}]
  %5 = xla_tuple %s3, %s4
  %s6 = sld [smem:[#allocation0]]
  $region57: #{tpu_custom_call.1} parent=0
    _
  %s8 = ssub.s32 1, %s6
  %s9 = scalar_select 0, %s8, %s6
  $region1: #{tpu_custom_call.1} parent=0
    #allocation2 [shape = 'u8[32768]{0}', space=vmem, size = 0x8000, scoped, tag = 'input window, operand 0']
    #allocation3 [shape = 's32[2]{0}', space=sflag, size = 0x8, scoped, tag = 'scoped memory for tpu_custom_call.1']
    %10 = vsyncpa [#allocation3], 0
    %s11 = scalar_lea.sflag [#allocation3], 1
    %12 = vsyncpa %s11, 0
    loop: start=0, step=1, limit=4
    $region2: #{tpu_custom_call.1} parent=1 // loop_pre_header
      _
    $region3: #{tpu_custom_call.1} parent=1 // loop_header
      %s14 = sphi 0, %s18
      %p15 = scmp.ge.s32.totalorder %s14, 4
      %s21 = sphi 0, %s33
      %s22 = sphi 0, %s29
      %s23 = sphi 0, %s21
      %s24 = sphi 0, %s22
      %s25 = sphi 0, %s23
      %s26 = sphi 0, %s24
      %s38 = sphi 0, %s40
      %s41 = sphi 0, %s38
      %s42 = sphi 0, %s41
      %s58 = sphi 0, %s42
      %s62 = sphi 0, %s62
      %s64 = sphi 0, %s62
      %s65 = sphi 0, %s64
      %s79 = sphi 0, %s65
      %s83 = sphi 0, %s83
      %s85 = sphi 0, %s83
      %s86 = sphi 0, %s85
      %s100 = sphi 0, %s86
      %s108 = sphi 0, %s110
      %s111 = sphi 0, %s108
      %s112 = sphi 0, %s111
      %s128 = sphi 0, %s112
      %s136 = sphi 0, %s138
      %s139 = sphi 0, %s136
      %s140 = sphi 0, %s139
      %s156 = sphi 0, %s140
    $region4: #{tpu_custom_call.1} parent=1 // loop_header_branch
      %17 = sbr.rel (%p15) target = $region8
    $region5: #{tpu_custom_call.1} parent=1 // loop_body
      %s19 = ssub.s32 %s14, 1
      %s20 = ssub.s32 %s14, 2
      %s27 = sadd.s32 1, %s22
      %p28 = scmp.ge.s32.totalorder %s27, 1
      %s29 = scalar_select %p28, 0, %s27
      %s30 = sadd.s32 1, %s21
      %s31 = scalar_select %p28, %s30, %s21
      %p32 = scmp.ge.s32.totalorder %s31, 2
      %s33 = scalar_select %p32, 0, %s31
      %s34 = ssub.s32 %s21, %s33
      %s35 = ssub.s32 %s22, %s29
      %s36 = sor.u32 %s34, %s35
      %p37 = scmp.eq.s32.totalorder %s36, 0
      %s39 = sadd.s32 %s38, 1
      %s40 = scalar_select %p37, %s38, %s39
      %p43 = pneg %p37
      %p44 = scmp.eq.s32.totalorder %s14, 1
      %p45 = por %p43, %p44
      %p46 = scmp.ne.s32.totalorder %s38, %s41
      %p47 = scmp.eq.s32.totalorder %s14, 0
      %p48 = por %p46, %p47
      %p49 = scmp.ne.s32.totalorder %s38, %s41
      %p50 = scmp.eq.s32.totalorder %s19, 1
      %p51 = por %p49, %p50
      %p52 = scmp.ne.s32.totalorder %s41, %s42
      %p53 = scmp.eq.s32.totalorder %s19, 0
      %p54 = por %p52, %p53
      %p55 = scmp.ne.s32.totalorder %s41, %s42
      %p56 = scmp.eq.s32.totalorder %s20, 1
      %p57 = por %p55, %p56
      %p59 = scmp.ne.s32.totalorder %s42, %s58
      %p60 = scmp.eq.s32.totalorder %s20, 0
      %p61 = por %p59, %p60
      %s63 = sadd.s32 %s62, 1
      %p66 = scmp.eq.s32.totalorder %s14, 1
      %p67 = scmp.ne.s32.totalorder %s62, %s64
      %p68 = scmp.eq.s32.totalorder %s14, 0
      %p69 = por %p67, %p68
      %p70 = scmp.ne.s32.totalorder %s62, %s64
      %p71 = scmp.eq.s32.totalorder %s19, 1
      %p72 = por %p70, %p71
      %p73 = scmp.ne.s32.totalorder %s64, %s65
      %p74 = scmp.eq.s32.totalorder %s19, 0
      %p75 = por %p73, %p74
      %p76 = scmp.ne.s32.totalorder %s64, %s65
      %p77 = scmp.eq.s32.totalorder %s20, 1
      %p78 = por %p76, %p77
      %p80 = scmp.ne.s32.totalorder %s65, %s79
      %p81 = scmp.eq.s32.totalorder %s20, 0
      %p82 = por %p80, %p81
      %s84 = sadd.s32 %s83, 1
      %p87 = scmp.eq.s32.totalorder %s14, 1
      %p88 = scmp.ne.s32.totalorder %s83, %s85
      %p89 = scmp.eq.s32.totalorder %s14, 0
      %p90 = por %p88, %p89
      %p91 = scmp.ne.s32.totalorder %s83, %s85
      %p92 = scmp.eq.s32.totalorder %s19, 1
      %p93 = por %p91, %p92
      %p94 = scmp.ne.s32.totalorder %s85, %s86
      %p95 = scmp.eq.s32.totalorder %s19, 0
      %p96 = por %p94, %p95
      %p97 = scmp.ne.s32.totalorder %s85, %s86
      %p98 = scmp.eq.s32.totalorder %s20, 1
      %p99 = por %p97, %p98
      %p101 = scmp.ne.s32.totalorder %s86, %s100
      %p102 = scmp.eq.s32.totalorder %s20, 0
      %p103 = por %p101, %p102
      %s104 = ssub.s32 %s21, %s33
      %s105 = ssub.s32 %s22, %s29
      %s106 = sor.u32 %s104, %s105
      %p107 = scmp.eq.s32.totalorder %s106, 0
      %s109 = sadd.s32 %s108, 1
      %s110 = scalar_select %p107, %s108, %s109
      %p113 = pneg %p107
      %p114 = scmp.eq.s32.totalorder %s14, 1
      %p115 = por %p113, %p114
      %p116 = scmp.ne.s32.totalorder %s108, %s111
      %p117 = scmp.eq.s32.totalorder %s14, 0
      %p118 = por %p116, %p117
      %p119 = scmp.ne.s32.totalorder %s108, %s111
      %p120 = scmp.eq.s32.totalorder %s19, 1
      %p121 = por %p119, %p120
      %p122 = scmp.ne.s32.totalorder %s111, %s112
      %p123 = scmp.eq.s32.totalorder %s19, 0
      %p124 = por %p122, %p123
      %p125 = scmp.ne.s32.totalorder %s111, %s112
      %p126 = scmp.eq.s32.totalorder %s20, 1
      %p127 = por %p125, %p126
      %p129 = scmp.ne.s32.totalorder %s112, %s128
      %p130 = scmp.eq.s32.totalorder %s20, 0
      %p131 = por %p129, %p130
      %s132 = ssub.s32 %s21, %s33
      %s133 = ssub.s32 %s22, %s29
      %s134 = sor.u32 %s132, %s133
      %p135 = scmp.eq.s32.totalorder %s134, 0
      %s137 = sadd.s32 %s136, 1
      %s138 = scalar_select %p135, %s136, %s137
      %p141 = pneg %p135
      %p142 = scmp.eq.s32.totalorder %s14, 1
      %p143 = por %p141, %p142
      %p144 = scmp.ne.s32.totalorder %s136, %s139
      %p145 = scmp.eq.s32.totalorder %s14, 0
      %p146 = por %p144, %p145
      %p147 = scmp.ne.s32.totalorder %s136, %s139
      %p148 = scmp.eq.s32.totalorder %s19, 1
      %p149 = por %p147, %p148
      %p150 = scmp.ne.s32.totalorder %s139, %s140
      %p151 = scmp.eq.s32.totalorder %s19, 0
      %p152 = por %p150, %p151
      %p153 = scmp.ne.s32.totalorder %s139, %s140
      %p154 = scmp.eq.s32.totalorder %s20, 1
      %p155 = por %p153, %p154
      %p157 = scmp.ne.s32.totalorder %s140, %s156
      %p158 = scmp.eq.s32.totalorder %s20, 0
      %p159 = por %p157, %p158
      %p160 = scmp.le.s32.totalorder 1, %s14
      %p161 = scmp.lt.s32.totalorder %s14, 3
      %p162 = pnand %p160, %p161
      %p163 = pneg %p162
      // Predicated region
      $region9: #{tpu_custom_call.1} parent=5 // pred_check
        _
      $region10: #{tpu_custom_call.1} parent=5 // pred_check_branch
        %165 = sbr.rel (%p162) target = $region12
      $region11: #{tpu_custom_call.1} parent=5 // pred_region
        %s166 = ssub.s32 %s14, 1
        // Predicated region
        $region13: #{tpu_custom_call.1} parent=11 // pred_check
          %p167 = pneg %p75
        $region14: #{tpu_custom_call.1} parent=11 // pred_check_branch
          %169 = sbr.rel (%p167) target = $region16
        $region15: #{tpu_custom_call.1} parent=11 // pred_region
          _
        $region16: #{tpu_custom_call.1} parent=11 // pred_fallthru
          _
        // Predicated region
        $region17: #{tpu_custom_call.1} parent=11 // pred_check
          %p170 = pneg %p96
        $region18: #{tpu_custom_call.1} parent=11 // pred_check_branch
          %172 = sbr.rel (%p170) target = $region20
        $region19: #{tpu_custom_call.1} parent=11 // pred_region
          _
        $region20: #{tpu_custom_call.1} parent=11 // pred_fallthru
          _
      $region12: #{tpu_custom_call.1} parent=5 // pred_fallthru
        _
      %p173 = scmp.lt.s32.totalorder %s14, 2
      // Predicated region
      $region21: #{tpu_custom_call.1} parent=5 // pred_check
        %p174 = pneg %p173
      $region22: #{tpu_custom_call.1} parent=5 // pred_check_branch
        %176 = sbr.rel (%p174) target = $region24
      $region23: #{tpu_custom_call.1} parent=5 // pred_region
        // Predicated region
        $region25: #{tpu_custom_call.1} parent=23 // pred_check
          %p177 = pneg %p48
        $region26: #{tpu_custom_call.1} parent=23 // pred_check_branch
          %179 = sbr.rel (%p177) target = $region28
        $region27: #{tpu_custom_call.1} parent=23 // pred_region
          %s180 = sand.u32 %s38, 1
          %s181 = scalar_lea.sflag [#allocation3], %s180
          %s182 = sand.u32 %s38, 1
          %s183 = smul.addr %s182, 32
          %s184 = scalar_lea.vmem [#allocation2], %s183
          %s185 = smul.u32 4, %s22
          %187 = vsyncadd %s181, 0
          %s188 = smul.addr %s21, 4
          %s189 = sadd.s32 %s185, %s188
          %s190 = smul.addr %s189, 8
          %s191 = scalar_lea.hbm %s0, %s190
          %s193 = sshll.u32 %s191, 4
          %s194 = int_to_ptr.hbm [resolvable:$true] %s193
          %s195 = sshll.u32 %s184, 4
          %s196 = int_to_ptr.vmem [resolvable:$true] %s195
          %198 = dma.hbm_to_vmem [thread:$0]  %s194, 512, %s196, %s181
        $region28: #{tpu_custom_call.1} parent=23 // pred_fallthru
          _
      $region24: #{tpu_custom_call.1} parent=5 // pred_fallthru
        _
      %p199 = scmp.le.s32.totalorder 1, %s14
      %p200 = scmp.lt.s32.totalorder %s14, 3
      %p201 = pnand %p199, %p200
      %p202 = pneg %p201
      // Predicated region
      $region29: #{tpu_custom_call.1} parent=5 // pred_check
        _
      $region30: #{tpu_custom_call.1} parent=5 // pred_check_branch
        %204 = sbr.rel (%p201) target = $region32
      $region31: #{tpu_custom_call.1} parent=5 // pred_region
        %s205 = ssub.s32 %s14, 1
        %s206 = sand.u32 %s41, 1
        %s207 = scalar_lea.sflag [#allocation3], %s206
        %s208 = sand.u32 %s41, 1
        %s209 = smul.addr %s208, 32
        %s210 = scalar_lea.vmem [#allocation2], %s209
        // Predicated region
        $region33: #{tpu_custom_call.1} parent=31 // pred_check
          %p211 = pneg %p54
        $region34: #{tpu_custom_call.1} parent=31 // pred_check_branch
          %213 = sbr.rel (%p211) target = $region36
        $region35: #{tpu_custom_call.1} parent=31 // pred_region
          %215 = dma.done %s207, 512
        $region36: #{tpu_custom_call.1} parent=31 // pred_fallthru
          _
        %s216 = sand.u32 %s41, 1
        %s217 = scalar_lea.sflag [#allocation3], %s216
        %s218 = sand.u32 %s41, 1
        %s219 = smul.addr %s218, 32
        %s220 = scalar_lea.vmem [#allocation2], %s219
        %p221 = pneg %p54
        %p222 = pneg %p51
        %p223 = pneg %p75
        %p224 = pneg %p72
        %p225 = pneg %p96
        %p226 = pneg %p93
        %p227 = pneg %p124
        %p228 = pneg %p121
        %s229 = smul.u32 4, %s24
        %p230 = scmp.lt.s32.totalorder %s23, 1
        %s231 = scalar_select %p230, %s23, 1
        %p232 = scmp.lt.s32.totalorder %s229, 3
        %s233 = scalar_select %p232, %s229, 3
        %s234 = smul.addr %s231, 12
        %s235 = sadd.s32 %s233, %s234
        %s236 = smul.addr %s235, 8
        %s237 = scalar_lea.vmem %s3, %s236
        %p238 = pneg %p152
        %p239 = pneg %p149
        %s240 = smul.u32 4, %s24
        %p241 = scmp.lt.s32.totalorder %s23, 1
        %s242 = scalar_select %p241, %s23, 1
        %p243 = scmp.lt.s32.totalorder %s240, 3
        %s244 = scalar_select %p243, %s240, 3
        %s245 = smul.addr %s242, 12
        %s246 = sadd.s32 %s244, %s245
        %s247 = smul.addr %s246, 8
        %s248 = scalar_lea.vmem %s4, %s247
        %s249 = smul.u32 4, %s24
        %s250 = smul.u32 4, %s24
        %p251 = scmp.lt.s32.totalorder %s23, 1
        %s252 = scalar_select %p251, %s23, 1
        %p253 = scmp.lt.s32.totalorder %s250, 3
        %s254 = scalar_select %p253, %s250, 3
        %s255 = smul.addr %s252, 12
        %s256 = sadd.s32 %s254, %s255
        %s257 = smul.addr %s256, 8
        %s258 = scalar_lea.vmem %s3, %s257
        %s259 = smul.u32 4, %s24
        %s260 = smul.u32 4, %s24
        %p261 = scmp.lt.s32.totalorder %s23, 1
        %s262 = scalar_select %p261, %s23, 1
        %p263 = scmp.lt.s32.totalorder %s260, 3
        %s264 = scalar_select %p263, %s260, 3
        %s265 = smul.addr %s262, 12
        %s266 = sadd.s32 %s264, %s265
        %s267 = smul.addr %s266, 8
        %s268 = scalar_lea.vmem %s4, %s267
        %s269 = smul.u32 4, %s24
        %v270 = vld [vmem:[%s2] sm:$0xff]
        %v271 = vld [vmem:[%s2 + $0x8] sm:$0xff]
        %v272 = vld [vmem:[%s2 + $0x10] sm:$0x1f]
        %v273 = vld [vmem:[%s1] sm:$0xff]
        %v274 = vld [vmem:[%s1 + $0x8] sm:$0xff]
        %v275 = vld [vmem:[%s1 + $0x10] sm:$0x1f]
        %v276 = vld [vmem:[%s210] sm:$0xff]
        %v277 = vld [vmem:[%s210 + $0x8] sm:$0xff]
        %v278 = vld [vmem:[%s210 + $0x10] sm:$0xff]
        %v279 = vld [vmem:[%s210 + $0x18] sm:$0xff]
        %281 = vset.pattern.permute.xlu0 0
        %282 = vperm.xlu0 %281, %v270
        %v283 = vpop.permute.xlu0 %282
        %286 = vset.pattern.permute.xlu0 0
        %287 = vperm.xlu0 %286, %v271
        %v288 = vpop.permute.xlu0 %287
        %291 = vset.pattern.permute.xlu0 0
        %292 = vperm.xlu0 %291, %v272
        %v293 = vpop.permute.xlu0 %292
        %vm295 = vcmask 64512
        %v297 = vsel %vm295, %v273, 0
        %v300 = vsel %vm295, %v274, 0
        %v303 = vsel %vm295, %v275, 0
        %305 = vmatpush.msra.mxu0 0.0
        %306 = vmatpush.msra.mxu0 0.0
        %307 = vmatpush.msra.mxu0 0.0
        %308 = vmatpush.msra.mxu0 0.0
        %309 = vmatpush.msra.mxu0 0.0
        %310 = vmatpush.msra.mxu0 0.0
        %311 = vmatpush.msra.mxu0 0.0
        %312 = vmatpush.msra.mxu0 0.0
        %313 = vmatpush.msra.mxu0 0.0
        %314 = vmatpush.msra.mxu0 0.0
        %315 = vmatpush.msra.mxu0 0.0
        %316 = vmatpush.msra.mxu0 0.0
        %317 = vmatpush.msra.mxu0 0.0
        %318 = vmatpush.msra.mxu0 0.0
        %319 = vmatpush.msra.mxu0 0.0
        %320 = vmatpush.msra.mxu0 %v276
        %321 = vmatmul.f32.gmra.mxu0 %v297
        %v322 = vpop.f32.mrf.mxu0
        %v323 = vadd.f32 %v283, %v322
        %324 = vmatmul.f32.gmra.mxu0 %v300
        %v325 = vpop.f32.mrf.mxu0
        %v326 = vadd.f32 %v288, %v325
        %327 = vmatmul.f32.gmra.mxu0 %v303
        %v328 = vpop.f32.mrf.mxu0
        %v329 = vadd.f32 %v293, %v328
        %330 = vdwg.mxu0
        %331 = vmatpush.msra.mxu0 0.0
        %332 = vmatpush.msra.mxu0 0.0
        %333 = vmatpush.msra.mxu0 0.0
        %334 = vmatpush.msra.mxu0 0.0
        %335 = vmatpush.msra.mxu0 0.0
        %336 = vmatpush.msra.mxu0 0.0
        %337 = vmatpush.msra.mxu0 0.0
        %338 = vmatpush.msra.mxu0 0.0
        %339 = vmatpush.msra.mxu0 0.0
        %340 = vmatpush.msra.mxu0 0.0
        %341 = vmatpush.msra.mxu0 0.0
        %342 = vmatpush.msra.mxu0 0.0
        %343 = vmatpush.msra.mxu0 0.0
        %344 = vmatpush.msra.mxu0 0.0
        %345 = vmatpush.msra.mxu0 0.0
        %346 = vmatpush.msra.mxu0 %v277
        %347 = vmatmul.f32.gmra.mxu0 %v297
        %v348 = vpop.f32.mrf.mxu0
        %v349 = vadd.f32 %v283, %v348
        %350 = vmatmul.f32.gmra.mxu0 %v300
        %v351 = vpop.f32.mrf.mxu0
        %v352 = vadd.f32 %v288, %v351
        %353 = vmatmul.f32.gmra.mxu0 %v303
        %v354 = vpop.f32.mrf.mxu0
        %v355 = vadd.f32 %v293, %v354
        %356 = vdwg.mxu0
        %357 = vmatpush.msra.mxu0 0.0
        %358 = vmatpush.msra.mxu0 0.0
        %359 = vmatpush.msra.mxu0 0.0
        %360 = vmatpush.msra.mxu0 0.0
        %361 = vmatpush.msra.mxu0 0.0
        %362 = vmatpush.msra.mxu0 0.0
        %363 = vmatpush.msra.mxu0 0.0
        %364 = vmatpush.msra.mxu0 0.0
        %365 = vmatpush.msra.mxu0 0.0
        %366 = vmatpush.msra.mxu0 0.0
        %367 = vmatpush.msra.mxu0 0.0
        %368 = vmatpush.msra.mxu0 0.0
        %369 = vmatpush.msra.mxu0 0.0
        %370 = vmatpush.msra.mxu0 0.0
        %371 = vmatpush.msra.mxu0 0.0
        %372 = vmatpush.msra.mxu0 %v278
        %373 = vmatmul.f32.gmra.mxu0 %v297
        %v374 = vpop.f32.mrf.mxu0
        %v375 = vadd.f32 %v283, %v374
        %376 = vmatmul.f32.gmra.mxu0 %v300
        %v377 = vpop.f32.mrf.mxu0
        %v378 = vadd.f32 %v288, %v377
        %379 = vmatmul.f32.gmra.mxu0 %v303
        %v380 = vpop.f32.mrf.mxu0
        %v381 = vadd.f32 %v293, %v380
        %382 = vdwg.mxu0
        %383 = vmatpush.msra.mxu0 0.0
        %384 = vmatpush.msra.mxu0 0.0
        %385 = vmatpush.msra.mxu0 0.0
        %386 = vmatpush.msra.mxu0 0.0
        %387 = vmatpush.msra.mxu0 0.0
        %388 = vmatpush.msra.mxu0 0.0
        %389 = vmatpush.msra.mxu0 0.0
        %390 = vmatpush.msra.mxu0 0.0
        %391 = vmatpush.msra.mxu0 0.0
        %392 = vmatpush.msra.mxu0 0.0
        %393 = vmatpush.msra.mxu0 0.0
        %394 = vmatpush.msra.mxu0 0.0
        %395 = vmatpush.msra.mxu0 0.0
        %396 = vmatpush.msra.mxu0 0.0
        %397 = vmatpush.msra.mxu0 0.0
        %398 = vmatpush.msra.mxu0 %v279
        %399 = vmatmul.f32.gmra.mxu0 %v297
        %v400 = vpop.f32.mrf.mxu0
        %v401 = vadd.f32 %v283, %v400
        %402 = vmatmul.f32.gmra.mxu0 %v300
        %v403 = vpop.f32.mrf.mxu0
        %v404 = vadd.f32 %v288, %v403
        %405 = vmatmul.f32.gmra.mxu0 %v303
        %v406 = vpop.f32.mrf.mxu0
        %v407 = vadd.f32 %v293, %v406
        %408 = vdwg.mxu0
        %409 = vst [vmem:[%s258] sm:$0xff] %v323
        %410 = vst [vmem:[%s258 + $0x8] sm:$0xff] %v349
        %411 = vst [vmem:[%s258 + $0x10] sm:$0xff] %v375
        %412 = vst [vmem:[%s258 + $0x18] sm:$0xff] %v401
        %413 = vst [vmem:[%s258 + $0x20] sm:$0xff] %v326
        %414 = vst [vmem:[%s258 + $0x28] sm:$0xff] %v352
        %415 = vst [vmem:[%s258 + $0x30] sm:$0xff] %v378
        %416 = vst [vmem:[%s258 + $0x38] sm:$0xff] %v404
        %417 = vst [vmem:[%s258 + $0x40] sm:$0x1f] %v329
        %418 = vst [vmem:[%s258 + $0x48] sm:$0x1f] %v355
        %419 = vst [vmem:[%s258 + $0x50] sm:$0x1f] %v381
        %420 = vst [vmem:[%s258 + $0x58] sm:$0x1f] %v407
        %v421 = vxor.u32 %v323, 2147483648
        %v422 = vxor.u32 %v349, 2147483648
        %v423 = vxor.u32 %v375, 2147483648
        %v424 = vxor.u32 %v401, 2147483648
        %v425 = vxor.u32 %v326, 2147483648
        %v426 = vxor.u32 %v352, 2147483648
        %v427 = vxor.u32 %v378, 2147483648
        %v428 = vxor.u32 %v404, 2147483648
        %v429 = vxor.u32 %v329, 2147483648
        %v430 = vxor.u32 %v355, 2147483648
        %v431 = vxor.u32 %v381, 2147483648
        %v432 = vxor.u32 %v407, 2147483648
        %v433 = vmul.f32 %v421, 1.442695
        %v434 = vpow.pop %v433
        %v435 = vmul.f32 %v422, 1.442695
        %v436 = vpow.pop %v435
        %v437 = vmul.f32 %v423, 1.442695
        %v438 = vpow.pop %v437
        %v439 = vmul.f32 %v424, 1.442695
        %v440 = vpow.pop %v439
        %v441 = vmul.f32 %v425, 1.442695
        %v442 = vpow.pop %v441
        %v443 = vmul.f32 %v426, 1.442695
        %v444 = vpow.pop %v443
        %v445 = vmul.f32 %v427, 1.442695
        %v446 = vpow.pop %v445
        %v447 = vmul.f32 %v428, 1.442695
        %v448 = vpow.pop %v447
        %v449 = vmul.f32 %v429, 1.442695
        %v450 = vpow.pop %v449
        %v451 = vmul.f32 %v430, 1.442695
        %v452 = vpow.pop %v451
        %v453 = vmul.f32 %v431, 1.442695
        %v454 = vpow.pop %v453
        %v455 = vmul.f32 %v432, 1.442695
        %v456 = vpow.pop %v455
        %v457 = vadd.f32 %v434, 1.0
        %v458 = vadd.f32 %v436, 1.0
        %v459 = vadd.f32 %v438, 1.0
        %v460 = vadd.f32 %v440, 1.0
        %v461 = vadd.f32 %v442, 1.0
        %v462 = vadd.f32 %v444, 1.0
        %v463 = vadd.f32 %v446, 1.0
        %v464 = vadd.f32 %v448, 1.0
        %v465 = vadd.f32 %v450, 1.0
        %v466 = vadd.f32 %v452, 1.0
        %v467 = vadd.f32 %v454, 1.0
        %v468 = vadd.f32 %v456, 1.0
        %v469 = vrcp.pop %v457
        %v470 = vmul.f32 %v457, %v469
        %v471 = vsub.f32 1.0, %v470
        %v472 = vmul.f32 %v469, %v471
        %v473 = vadd.f32 %v469, %v472
        %vm474 = vweird.f32 %v457
        %vm475 = vweird.f32 %v469
        %vm476 = vmor %vm474, %vm475
        %v477 = vsel %vm476, %v469, %v473
        %v478 = vand.u32 2147483647, %v457
        %vm479 = vcmp.eq.f32.partialorder %v478, 8.507059e+37
        %v480 = vand.u32 %v457, 2147483648
        %v481 = vor.u32 1.1754944e-38, %v480
        %v482 = vsel %vm479, %v481, %v477
        %v483 = vmul.f32 1.0, %v482
        %v484 = vrcp.pop %v458
        %v485 = vmul.f32 %v458, %v484
        %v486 = vsub.f32 1.0, %v485
        %v487 = vmul.f32 %v484, %v486
        %v488 = vadd.f32 %v484, %v487
        %vm489 = vweird.f32 %v458
        %vm490 = vweird.f32 %v484
        %vm491 = vmor %vm489, %vm490
        %v492 = vsel %vm491, %v484, %v488
        %v493 = vand.u32 2147483647, %v458
        %vm494 = vcmp.eq.f32.partialorder %v493, 8.507059e+37
        %v495 = vand.u32 %v458, 2147483648
        %v496 = vor.u32 1.1754944e-38, %v495
        %v497 = vsel %vm494, %v496, %v492
        %v498 = vmul.f32 1.0, %v497
        %v499 = vrcp.pop %v459
        %v500 = vmul.f32 %v459, %v499
        %v501 = vsub.f32 1.0, %v500
        %v502 = vmul.f32 %v499, %v501
        %v503 = vadd.f32 %v499, %v502
        %vm504 = vweird.f32 %v459
        %vm505 = vweird.f32 %v499
        %vm506 = vmor %vm504, %vm505
        %v507 = vsel %vm506, %v499, %v503
        %v508 = vand.u32 2147483647, %v459
        %vm509 = vcmp.eq.f32.partialorder %v508, 8.507059e+37
        %v510 = vand.u32 %v459, 2147483648
        %v511 = vor.u32 1.1754944e-38, %v510
        %v512 = vsel %vm509, %v511, %v507
        %v513 = vmul.f32 1.0, %v512
        %v514 = vrcp.pop %v460
        %v515 = vmul.f32 %v460, %v514
        %v516 = vsub.f32 1.0, %v515
        %v517 = vmul.f32 %v514, %v516
        %v518 = vadd.f32 %v514, %v517
        %vm519 = vweird.f32 %v460
        %vm520 = vweird.f32 %v514
        %vm521 = vmor %vm519, %vm520
        %v522 = vsel %vm521, %v514, %v518
        %v523 = vand.u32 2147483647, %v460
        %vm524 = vcmp.eq.f32.partialorder %v523, 8.507059e+37
        %v525 = vand.u32 %v460, 2147483648
        %v526 = vor.u32 1.1754944e-38, %v525
        %v527 = vsel %vm524, %v526, %v522
        %v528 = vmul.f32 1.0, %v527
        %v529 = vrcp.pop %v461
        %v530 = vmul.f32 %v461, %v529
        %v531 = vsub.f32 1.0, %v530
        %v532 = vmul.f32 %v529, %v531
        %v533 = vadd.f32 %v529, %v532
        %vm534 = vweird.f32 %v461
        %vm535 = vweird.f32 %v529
        %vm536 = vmor %vm534, %vm535
        %v537 = vsel %vm536, %v529, %v533
        %v538 = vand.u32 2147483647, %v461
        %vm539 = vcmp.eq.f32.partialorder %v538, 8.507059e+37
        %v540 = vand.u32 %v461, 2147483648
        %v541 = vor.u32 1.1754944e-38, %v540
        %v542 = vsel %vm539, %v541, %v537
        %v543 = vmul.f32 1.0, %v542
        %v544 = vrcp.pop %v462
        %v545 = vmul.f32 %v462, %v544
        %v546 = vsub.f32 1.0, %v545
        %v547 = vmul.f32 %v544, %v546
        %v548 = vadd.f32 %v544, %v547
        %vm549 = vweird.f32 %v462
        %vm550 = vweird.f32 %v544
        %vm551 = vmor %vm549, %vm550
        %v552 = vsel %vm551, %v544, %v548
        %v553 = vand.u32 2147483647, %v462
        %vm554 = vcmp.eq.f32.partialorder %v553, 8.507059e+37
        %v555 = vand.u32 %v462, 2147483648
        %v556 = vor.u32 1.1754944e-38, %v555
        %v557 = vsel %vm554, %v556, %v552
        %v558 = vmul.f32 1.0, %v557
        %v559 = vrcp.pop %v463
        %v560 = vmul.f32 %v463, %v559
        %v561 = vsub.f32 1.0, %v560
        %v562 = vmul.f32 %v559, %v561
        %v563 = vadd.f32 %v559, %v562
        %vm564 = vweird.f32 %v463
        %vm565 = vweird.f32 %v559
        %vm566 = vmor %vm564, %vm565
        %v567 = vsel %vm566, %v559, %v563
        %v568 = vand.u32 2147483647, %v463
        %vm569 = vcmp.eq.f32.partialorder %v568, 8.507059e+37
        %v570 = vand.u32 %v463, 2147483648
        %v571 = vor.u32 1.1754944e-38, %v570
        %v572 = vsel %vm569, %v571, %v567
        %v573 = vmul.f32 1.0, %v572
        %v574 = vrcp.pop %v464
        %v575 = vmul.f32 %v464, %v574
        %v576 = vsub.f32 1.0, %v575
        %v577 = vmul.f32 %v574, %v576
        %v578 = vadd.f32 %v574, %v577
        %vm579 = vweird.f32 %v464
        %vm580 = vweird.f32 %v574
        %vm581 = vmor %vm579, %vm580
        %v582 = vsel %vm581, %v574, %v578
        %v583 = vand.u32 2147483647, %v464
        %vm584 = vcmp.eq.f32.partialorder %v583, 8.507059e+37
        %v585 = vand.u32 %v464, 2147483648
        %v586 = vor.u32 1.1754944e-38, %v585
        %v587 = vsel %vm584, %v586, %v582
        %v588 = vmul.f32 1.0, %v587
        %v589 = vrcp.pop %v465
        %v590 = vmul.f32 %v465, %v589
        %v591 = vsub.f32 1.0, %v590
        %v592 = vmul.f32 %v589, %v591
        %v593 = vadd.f32 %v589, %v592
        %vm594 = vweird.f32 %v465
        %vm595 = vweird.f32 %v589
        %vm596 = vmor %vm594, %vm595
        %v597 = vsel %vm596, %v589, %v593
        %v598 = vand.u32 2147483647, %v465
        %vm599 = vcmp.eq.f32.partialorder %v598, 8.507059e+37
        %v600 = vand.u32 %v465, 2147483648
        %v601 = vor.u32 1.1754944e-38, %v600
        %v602 = vsel %vm599, %v601, %v597
        %v603 = vmul.f32 1.0, %v602
        %v604 = vrcp.pop %v466
        %v605 = vmul.f32 %v466, %v604
        %v606 = vsub.f32 1.0, %v605
        %v607 = vmul.f32 %v604, %v606
        %v608 = vadd.f32 %v604, %v607
        %vm609 = vweird.f32 %v466
        %vm610 = vweird.f32 %v604
        %vm611 = vmor %vm609, %vm610
        %v612 = vsel %vm611, %v604, %v608
        %v613 = vand.u32 2147483647, %v466
        %vm614 = vcmp.eq.f32.partialorder %v613, 8.507059e+37
        %v615 = vand.u32 %v466, 2147483648
        %v616 = vor.u32 1.1754944e-38, %v615
        %v617 = vsel %vm614, %v616, %v612
        %v618 = vmul.f32 1.0, %v617
        %v619 = vrcp.pop %v467
        %v620 = vmul.f32 %v467, %v619
        %v621 = vsub.f32 1.0, %v620
        %v622 = vmul.f32 %v619, %v621
        %v623 = vadd.f32 %v619, %v622
        %vm624 = vweird.f32 %v467
        %vm625 = vweird.f32 %v619
        %vm626 = vmor %vm624, %vm625
        %v627 = vsel %vm626, %v619, %v623
        %v628 = vand.u32 2147483647, %v467
        %vm629 = vcmp.eq.f32.partialorder %v628, 8.507059e+37
        %v630 = vand.u32 %v467, 2147483648
        %v631 = vor.u32 1.1754944e-38, %v630
        %v632 = vsel %vm629, %v631, %v627
        %v633 = vmul.f32 1.0, %v632
        %v634 = vrcp.pop %v468
        %v635 = vmul.f32 %v468, %v634
        %v636 = vsub.f32 1.0, %v635
        %v637 = vmul.f32 %v634, %v636
        %v638 = vadd.f32 %v634, %v637
        %vm639 = vweird.f32 %v468
        %vm640 = vweird.f32 %v634
        %vm641 = vmor %vm639, %vm640
        %v642 = vsel %vm641, %v634, %v638
        %v643 = vand.u32 2147483647, %v468
        %vm644 = vcmp.eq.f32.partialorder %v643, 8.507059e+37
        %v645 = vand.u32 %v468, 2147483648
        %v646 = vor.u32 1.1754944e-38, %v645
        %v647 = vsel %vm644, %v646, %v642
        %v648 = vmul.f32 1.0, %v647
        %s649 = smul.u32 %s24, 512
        %v650 = vlaneseq
        %v651 = vand.u32 %v650, 127
        %v652 = vadd.s32 %v651, 128
        %v653 = vadd.s32 %v651, 256
        %v654 = vadd.s32 %v651, 384
        %v655 = vstv %s649
        %v656 = vadd.s32 %v651, %v655
        %v657 = vadd.s32 %v652, %v655
        %v658 = vadd.s32 %v653, %v655
        %v659 = vadd.s32 %v654, %v655
        %v660 = vcvt.s32.f32 %v656
        %v661 = vcvt.s32.f32 %v657
        %v662 = vcvt.s32.f32 %v658
        %v663 = vcvt.s32.f32 %v659
        %v664 = vadd.f32 %v660, 0.5
        %v665 = vadd.f32 %v661, 0.5
        %v666 = vadd.f32 %v662, 0.5
        %v667 = vadd.f32 %v663, 0.5
        %v668 = vrcp.pop 8.0
        %v669 = vmul.f32 8.0, %v668
        %v670 = vsub.f32 1.0, %v669
        %v671 = vmul.f32 %v668, %v670
        %v672 = vadd.f32 %v668, %v671
        %vm673 = vweird.f32 %v668
        %v674 = vsel %vm673, %v668, %v672
        %v675 = vmul.f32 %v664, %v674
        %v676 = vmul.f32 %v665, %v674
        %v677 = vmul.f32 %v666, %v674
        %v678 = vmul.f32 %v667, %v674
        %v679 = vfloor.f32 %v675
        %v680 = vfloor.f32 %v676
        %v681 = vfloor.f32 %v677
        %v682 = vfloor.f32 %v678
        %v683 = vmul.f32 %v679, 8.0
        %v684 = vmul.f32 %v680, 8.0
        %v685 = vmul.f32 %v681, 8.0
        %v686 = vmul.f32 %v682, 8.0
        %v687 = vsub.f32 %v660, %v683
        %v688 = vsub.f32 %v661, %v684
        %v689 = vsub.f32 %v662, %v685
        %v690 = vsub.f32 %v663, %v686
        %691 = vset.pattern.permute.xlu0 1
        %692 = vperm.xlu0 %691, %v270
        %v693 = vpop.permute.xlu0 %692
        %695 = vset.pattern.permute.xlu0 1
        %696 = vperm.xlu0 %695, %v271
        %v697 = vpop.permute.xlu0 %696
        %699 = vset.pattern.permute.xlu0 1
        %700 = vperm.xlu0 %699, %v272
        %v701 = vpop.permute.xlu0 %700
        %v703 = vmul.f32 %v693, %v687
        %v704 = vmul.f32 %v693, %v688
        %v705 = vmul.f32 %v693, %v689
        %v706 = vmul.f32 %v693, %v690
        %v707 = vmul.f32 %v697, %v687
        %v708 = vmul.f32 %v697, %v688
        %v709 = vmul.f32 %v697, %v689
        %v710 = vmul.f32 %v697, %v690
        %v711 = vmul.f32 %v701, %v687
        %v712 = vmul.f32 %v701, %v688
        %v713 = vmul.f32 %v701, %v689
        %v714 = vmul.f32 %v701, %v690
        %715 = vset.pattern.permute.xlu0 2
        %716 = vperm.xlu0 %715, %v270
        %v717 = vpop.permute.xlu0 %716
        %719 = vset.pattern.permute.xlu0 2
        %720 = vperm.xlu0 %719, %v271
        %v721 = vpop.permute.xlu0 %720
        %723 = vset.pattern.permute.xlu0 2
        %724 = vperm.xlu0 %723, %v272
        %v725 = vpop.permute.xlu0 %724
        %v727 = vmul.f32 %v717, %v679
        %v728 = vmul.f32 %v717, %v680
        %v729 = vmul.f32 %v717, %v681
        %v730 = vmul.f32 %v717, %v682
        %v731 = vmul.f32 %v721, %v679
        %v732 = vmul.f32 %v721, %v680
        %v733 = vmul.f32 %v721, %v681
        %v734 = vmul.f32 %v721, %v682
        %v735 = vmul.f32 %v725, %v679
        %v736 = vmul.f32 %v725, %v680
        %v737 = vmul.f32 %v725, %v681
        %v738 = vmul.f32 %v725, %v682
        %v739 = vadd.f32 %v703, %v727
        %v740 = vadd.f32 %v704, %v728
        %v741 = vadd.f32 %v705, %v729
        %v742 = vadd.f32 %v706, %v730
        %v743 = vadd.f32 %v707, %v731
        %v744 = vadd.f32 %v708, %v732
        %v745 = vadd.f32 %v709, %v733
        %v746 = vadd.f32 %v710, %v734
        %v747 = vadd.f32 %v711, %v735
        %v748 = vadd.f32 %v712, %v736
        %v749 = vadd.f32 %v713, %v737
        %v750 = vadd.f32 %v714, %v738
        %751 = vrot.lane.b32.xlu0 %v270, 127
        %v752 = vpop.permute.xlu0 %751
        %753 = vrot.lane.b32.xlu0 %v271, 127
        %v754 = vpop.permute.xlu0 %753
        %755 = vrot.lane.b32.xlu0 %v272, 127
        %v756 = vpop.permute.xlu0 %755
        %v760 = vadd.f32 %v270, %v752
        %v761 = vadd.f32 %v271, %v754
        %v762 = vadd.f32 %v272, %v756
        %v763 = vmul.f32 %v483, 2.0
        %v764 = vmul.f32 %v498, 2.0
        %v765 = vmul.f32 %v513, 2.0
        %v766 = vmul.f32 %v528, 2.0
        %v767 = vmul.f32 %v543, 2.0
        %v768 = vmul.f32 %v558, 2.0
        %v769 = vmul.f32 %v573, 2.0
        %v770 = vmul.f32 %v588, 2.0
        %v771 = vmul.f32 %v603, 2.0
        %v772 = vmul.f32 %v618, 2.0
        %v773 = vmul.f32 %v633, 2.0
        %v774 = vmul.f32 %v648, 2.0
        %v775 = vsub.f32 %v763, 0.5
        %v776 = vsub.f32 %v764, 0.5
        %v777 = vsub.f32 %v765, 0.5
        %v778 = vsub.f32 %v766, 0.5
        %v779 = vsub.f32 %v767, 0.5
        %v780 = vsub.f32 %v768, 0.5
        %v781 = vsub.f32 %v769, 0.5
        %v782 = vsub.f32 %v770, 0.5
        %v783 = vsub.f32 %v771, 0.5
        %v784 = vsub.f32 %v772, 0.5
        %v785 = vsub.f32 %v773, 0.5
        %v786 = vsub.f32 %v774, 0.5
        %v787 = vadd.f32 %v775, %v739
        %v788 = vadd.f32 %v776, %v740
        %v789 = vadd.f32 %v777, %v741
        %v790 = vadd.f32 %v778, %v742
        %v791 = vadd.f32 %v779, %v743
        %v792 = vadd.f32 %v780, %v744
        %v793 = vadd.f32 %v781, %v745
        %v794 = vadd.f32 %v782, %v746
        %v795 = vadd.f32 %v783, %v747
        %v796 = vadd.f32 %v784, %v748
        %v797 = vadd.f32 %v785, %v749
        %v798 = vadd.f32 %v786, %v750
        %v799 = vmul.f32 %v787, 8.0
        %v800 = vmul.f32 %v788, 8.0
        %v801 = vmul.f32 %v789, 8.0
        %v802 = vmul.f32 %v790, 8.0
        %v803 = vmul.f32 %v791, 8.0
        %v804 = vmul.f32 %v792, 8.0
        %v805 = vmul.f32 %v793, 8.0
        %v806 = vmul.f32 %v794, 8.0
        %v807 = vmul.f32 %v795, 8.0
        %v808 = vmul.f32 %v796, 8.0
        %v809 = vmul.f32 %v797, 8.0
        %v810 = vmul.f32 %v798, 8.0
        %v811 = vmul.f32 %v763, %v763
        %v812 = vmul.f32 %v764, %v764
        %v813 = vmul.f32 %v765, %v765
        %v814 = vmul.f32 %v766, %v766
        %v815 = vmul.f32 %v767, %v767
        %v816 = vmul.f32 %v768, %v768
        %v817 = vmul.f32 %v769, %v769
        %v818 = vmul.f32 %v770, %v770
        %v819 = vmul.f32 %v771, %v771
        %v820 = vmul.f32 %v772, %v772
        %v821 = vmul.f32 %v773, %v773
        %v822 = vmul.f32 %v774, %v774
        %823 = vset.pattern.permute.xlu0 4
        %824 = vperm.xlu0 %823, %v270
        %v825 = vpop.permute.xlu0 %824
        %827 = vset.pattern.permute.xlu0 4
        %828 = vperm.xlu0 %827, %v271
        %v829 = vpop.permute.xlu0 %828
        %831 = vset.pattern.permute.xlu0 4
        %832 = vperm.xlu0 %831, %v272
        %v833 = vpop.permute.xlu0 %832
        %v835 = vmul.f32 %v811, %v825
        %v836 = vmul.f32 %v812, %v825
        %v837 = vmul.f32 %v813, %v825
        %v838 = vmul.f32 %v814, %v825
        %v839 = vmul.f32 %v815, %v829
        %v840 = vmul.f32 %v816, %v829
        %v841 = vmul.f32 %v817, %v829
        %v842 = vmul.f32 %v818, %v829
        %v843 = vmul.f32 %v819, %v833
        %v844 = vmul.f32 %v820, %v833
        %v845 = vmul.f32 %v821, %v833
        %v846 = vmul.f32 %v822, %v833
        %v847 = vsub.f32 %v799, %v483
        %v848 = vsub.f32 %v800, %v498
        %v849 = vsub.f32 %v801, %v513
        %v850 = vsub.f32 %v802, %v528
        %v851 = vsub.f32 %v803, %v543
        %v852 = vsub.f32 %v804, %v558
        %v853 = vsub.f32 %v805, %v573
        %v854 = vsub.f32 %v806, %v588
        %v855 = vsub.f32 %v807, %v603
        %v856 = vsub.f32 %v808, %v618
        %v857 = vsub.f32 %v809, %v633
        %v858 = vsub.f32 %v810, %v648
        %860 = vset.pattern.permute.xlu0 1
        %861 = vperm.xlu0 %860, %v760
        %v862 = vpop.permute.xlu0 %861
        %865 = vset.pattern.permute.xlu0 1
        %866 = vperm.xlu0 %865, %v761
        %v867 = vpop.permute.xlu0 %866
        %870 = vset.pattern.permute.xlu0 1
        %871 = vperm.xlu0 %870, %v762
        %v872 = vpop.permute.xlu0 %871
        %v874 = vmul.f32 %v862, %v847
        %v875 = vmul.f32 %v862, %v848
        %v876 = vmul.f32 %v862, %v849
        %v877 = vmul.f32 %v862, %v850
        %v878 = vmul.f32 %v867, %v851
        %v879 = vmul.f32 %v867, %v852
        %v880 = vmul.f32 %v867, %v853
        %v881 = vmul.f32 %v867, %v854
        %v882 = vmul.f32 %v872, %v855
        %v883 = vmul.f32 %v872, %v856
        %v884 = vmul.f32 %v872, %v857
        %v885 = vmul.f32 %v872, %v858
        %v886 = vadd.f32 %v483, %v874
        %v887 = vadd.f32 %v498, %v875
        %v888 = vadd.f32 %v513, %v876
        %v889 = vadd.f32 %v528, %v877
        %v890 = vadd.f32 %v543, %v878
        %v891 = vadd.f32 %v558, %v879
        %v892 = vadd.f32 %v573, %v880
        %v893 = vadd.f32 %v588, %v881
        %v894 = vadd.f32 %v603, %v882
        %v895 = vadd.f32 %v618, %v883
        %v896 = vadd.f32 %v633, %v884
        %v897 = vadd.f32 %v648, %v885
        %v898 = vsub.f32 %v835, %v483
        %v899 = vsub.f32 %v836, %v498
        %v900 = vsub.f32 %v837, %v513
        %v901 = vsub.f32 %v838, %v528
        %v902 = vsub.f32 %v839, %v543
        %v903 = vsub.f32 %v840, %v558
        %v904 = vsub.f32 %v841, %v573
        %v905 = vsub.f32 %v842, %v588
        %v906 = vsub.f32 %v843, %v603
        %v907 = vsub.f32 %v844, %v618
        %v908 = vsub.f32 %v845, %v633
        %v909 = vsub.f32 %v846, %v648
        %910 = vset.pattern.permute.xlu0 3
        %911 = vperm.xlu0 %910, %v270
        %v912 = vpop.permute.xlu0 %911
        %914 = vset.pattern.permute.xlu0 3
        %915 = vperm.xlu0 %914, %v271
        %v916 = vpop.permute.xlu0 %915
        %918 = vset.pattern.permute.xlu0 3
        %919 = vperm.xlu0 %918, %v272
        %v920 = vpop.permute.xlu0 %919
        %v922 = vmul.f32 %v912, %v898
        %v923 = vmul.f32 %v912, %v899
        %v924 = vmul.f32 %v912, %v900
        %v925 = vmul.f32 %v912, %v901
        %v926 = vmul.f32 %v916, %v902
        %v927 = vmul.f32 %v916, %v903
        %v928 = vmul.f32 %v916, %v904
        %v929 = vmul.f32 %v916, %v905
        %v930 = vmul.f32 %v920, %v906
        %v931 = vmul.f32 %v920, %v907
        %v932 = vmul.f32 %v920, %v908
        %v933 = vmul.f32 %v920, %v909
        %v934 = vadd.f32 %v886, %v922
        %v935 = vadd.f32 %v887, %v923
        %v936 = vadd.f32 %v888, %v924
        %v937 = vadd.f32 %v889, %v925
        %v938 = vadd.f32 %v890, %v926
        %v939 = vadd.f32 %v891, %v927
        %v940 = vadd.f32 %v892, %v928
        %v941 = vadd.f32 %v893, %v929
        %v942 = vadd.f32 %v894, %v930
        %v943 = vadd.f32 %v895, %v931
        %v944 = vadd.f32 %v896, %v932
        %v945 = vadd.f32 %v897, %v933
        %946 = vst [vmem:[%s268] sm:$0xff] %v934
        %947 = vst [vmem:[%s268 + $0x8] sm:$0xff] %v935
        %948 = vst [vmem:[%s268 + $0x10] sm:$0xff] %v936
        %949 = vst [vmem:[%s268 + $0x18] sm:$0xff] %v937
        %950 = vst [vmem:[%s268 + $0x20] sm:$0xff] %v938
        %951 = vst [vmem:[%s268 + $0x28] sm:$0xff] %v939
        %952 = vst [vmem:[%s268 + $0x30] sm:$0xff] %v940
        %953 = vst [vmem:[%s268 + $0x38] sm:$0xff] %v941
        %954 = vst [vmem:[%s268 + $0x40] sm:$0x1f] %v942
        %955 = vst [vmem:[%s268 + $0x48] sm:$0x1f] %v943
        %956 = vst [vmem:[%s268 + $0x50] sm:$0x1f] %v944
        %957 = vst [vmem:[%s268 + $0x58] sm:$0x1f] %v945
        %s958 = smul.u32 4, %s24
        %p959 = scmp.lt.s32.totalorder %s23, 1
        %s960 = scalar_select %p959, %s23, 1
        %p961 = scmp.lt.s32.totalorder %s958, 3
        %s962 = scalar_select %p961, %s958, 3
        %s963 = smul.addr %s960, 12
        %s964 = sadd.s32 %s962, %s963
        %s965 = smul.addr %s964, 8
        %s966 = scalar_lea.vmem %s3, %s965
        %s967 = smul.u32 4, %s24
        %p968 = scmp.lt.s32.totalorder %s23, 1
        %s969 = scalar_select %p968, %s23, 1
        %p970 = scmp.lt.s32.totalorder %s967, 3
        %s971 = scalar_select %p970, %s967, 3
        %s972 = smul.addr %s969, 12
        %s973 = sadd.s32 %s971, %s972
        %s974 = smul.addr %s973, 8
        %s975 = scalar_lea.vmem %s4, %s974
        // Predicated region
        $region37: #{tpu_custom_call.1} parent=31 // pred_check
          %p976 = pneg %p121
        $region38: #{tpu_custom_call.1} parent=31 // pred_check_branch
          %978 = sbr.rel (%p976) target = $region40
        $region39: #{tpu_custom_call.1} parent=31 // pred_region
          %s979 = smul.u32 4, %s24
        $region40: #{tpu_custom_call.1} parent=31 // pred_fallthru
          _
        // Predicated region
        $region41: #{tpu_custom_call.1} parent=31 // pred_check
          %p980 = pneg %p149
        $region42: #{tpu_custom_call.1} parent=31 // pred_check_branch
          %982 = sbr.rel (%p980) target = $region44
        $region43: #{tpu_custom_call.1} parent=31 // pred_region
          %s983 = smul.u32 4, %s24
        $region44: #{tpu_custom_call.1} parent=31 // pred_fallthru
          _
      $region32: #{tpu_custom_call.1} parent=5 // pred_fallthru
        _
      %p984 = scmp.le.s32.totalorder 2, %s14
      // Predicated region
      $region45: #{tpu_custom_call.1} parent=5 // pred_check
        %p985 = pneg %p984
      $region46: #{tpu_custom_call.1} parent=5 // pred_check_branch
        %987 = sbr.rel (%p985) target = $region48
      $region47: #{tpu_custom_call.1} parent=5 // pred_region
        %s988 = ssub.s32 %s14, 2
        // Predicated region
        $region49: #{tpu_custom_call.1} parent=47 // pred_check
          %p989 = pneg %p127
        $region50: #{tpu_custom_call.1} parent=47 // pred_check_branch
          %991 = sbr.rel (%p989) target = $region52
        $region51: #{tpu_custom_call.1} parent=47 // pred_region
          %s992 = smul.u32 4, %s26
          %p993 = scmp.lt.s32.totalorder %s25, 1
          %s994 = scalar_select %p993, %s25, 1
          %p995 = scmp.lt.s32.totalorder %s992, 3
          %s996 = scalar_select %p995, %s992, 3
          %s997 = smul.addr %s994, 12
          %s998 = sadd.s32 %s996, %s997
          %s999 = smul.addr %s998, 8
          %s1000 = scalar_lea.vmem %s3, %s999
        $region52: #{tpu_custom_call.1} parent=47 // pred_fallthru
          _
        // Predicated region
        $region53: #{tpu_custom_call.1} parent=47 // pred_check
          %p1001 = pneg %p155
        $region54: #{tpu_custom_call.1} parent=47 // pred_check_branch
          %1003 = sbr.rel (%p1001) target = $region56
        $region55: #{tpu_custom_call.1} parent=47 // pred_region
          %s1004 = smul.u32 4, %s26
          %p1005 = scmp.lt.s32.totalorder %s25, 1
          %s1006 = scalar_select %p1005, %s25, 1
          %p1007 = scmp.lt.s32.totalorder %s1004, 3
          %s1008 = scalar_select %p1007, %s1004, 3
          %s1009 = smul.addr %s1006, 12
          %s1010 = sadd.s32 %s1008, %s1009
          %s1011 = smul.addr %s1010, 8
          %s1012 = scalar_lea.vmem %s4, %s1011
        $region56: #{tpu_custom_call.1} parent=47 // pred_fallthru
          _
      $region48: #{tpu_custom_call.1} parent=5 // pred_fallthru
        _
    $region6: #{tpu_custom_call.1} parent=1 // loop_footer
      %s18 = sadd.s32 1, %s14
    $region7: #{tpu_custom_call.1} parent=1 // loop_footer_branch
      %13 = sbr.rel target = $region3
    $region8: #{tpu_custom_call.1} parent=1 // loop_exit
      _
    %1013 = vsyncpa [#allocation3], 1
    %s1014 = scalar_lea.sflag [#allocation3], 1
    %1015 = vsyncpa %s1014, 1

</llo_original>
